<compile_context>
chip_gen: v5e
topology: v5e:2x2
jax: 0.10.0
libtpu: 0.0.40
codegen_flags: <defaults>
</compile_context>

<pallas_src>
import jax
import jax.numpy as jnp
from jax.experimental import pallas as pl
from jax.experimental.pallas import tpu as pltpu


def mlp_kernel(x_ref,
               w1_ref, b1_ref,
               w2_ref, b2_ref,
               w3_ref, b3_ref,
               w4_ref, b4_ref,
               o_ref):
    """One batch tile. x_ref: [4, TB] (features x batch), o_ref: [1, TB]."""
    x = x_ref[...]                                                   # bf16 [4, TB]

    # Layer 1: [16, 4] @ [4, TB] -> f32 [16, TB]
    h = jnp.dot(w1_ref[...], x, preferred_element_type=jnp.float32) + b1_ref[...]
    h = jnp.maximum(h, 0.0)

    # Layer 2: [16, 16] @ [16, TB]
    h = jnp.dot(w2_ref[...], h.astype(w2_ref.dtype),
                preferred_element_type=jnp.float32) + b2_ref[...]
    h = jnp.maximum(h, 0.0)

    # Layer 3: [16, 16] @ [16, TB]
    h = jnp.dot(w3_ref[...], h.astype(w3_ref.dtype),
                preferred_element_type=jnp.float32) + b3_ref[...]
    h = jnp.maximum(h, 0.0)

    # Layer 4: [8, 16] @ [16, TB]  (only sublane 0 is the real output)
    h = jnp.dot(w4_ref[...], h.astype(w4_ref.dtype),
                preferred_element_type=jnp.float32) + b4_ref[...]

    # Sigmoid on the EUP, on the single real output row only. Clamp only the
    # overflow side of exp(-h): large positive h harmlessly underflows to 0.
    logits = h[0:1, :]
    z = jnp.exp(-jnp.maximum(logits, -30.0))
    o_ref[...] = pl.reciprocal(1.0 + z, approx=True).astype(o_ref.dtype)


def _round_up(v, m):
    return -(-v // m) * m


def _pad2d(a, rows, cols):
    r, c = a.shape
    return jnp.pad(a, ((0, rows - r), (0, cols - c)))


def _pick_batch_tile(batch, requested):
    """Large lane-dense tiles amortize per-grid-step overhead; keep >=2 tiles
    for big batches (v7x dual TensorCore) and cap well inside VMEM."""
    if requested is not None:
        return max(128, _round_up(requested, 128))
    return max(128, min(32768, _round_up(pl.cdiv(batch, 2), 128)))


def neural_network_forward(x, params, *, batch_tile=None,
                           compute_dtype=jnp.bfloat16):
    """x: [B, 4] float32. params: [(w, b)] with w [in, out], b [out].
    Returns [B, 1] float32 = sigmoid(MLP(x))."""
    B, F = x.shape
    TB = _pick_batch_tile(B, batch_tile)
    n_tiles = pl.cdiv(B, TB)
    Bp = n_tiles * TB

    # Feature dims at every stage; hidden/output dims padded to a multiple of 8
    # sublanes (the 4 input features stay as-is: block == full array dim).
    feat = [F] + [w.shape[1] for w, _ in params]            # [4, 10, 10, 15, 1]
    feat_pad = [F] + [_round_up(f, 8) for f in feat[1:]]    # [4, 16, 16, 16, 8]

    # Transposed + zero-padded weights / biases (resident VMEM blocks).
    w_pads, b_pads = [], []
    for li, (w, b) in enumerate(params):
        wt = w.T                                            # [out, in]
        w_pads.append(_pad2d(wt, feat_pad[li + 1], feat_pad[li]).astype(compute_dtype))
        b_pads.append(_pad2d(b.reshape(-1, 1), feat_pad[li + 1], 1).astype(jnp.float32))

    # Batch-on-lanes input: [4, Bp] bf16, zero-padded batch tail. Marked as
    # fusible into the pallas_call operand (allow_input_fusion) so XLA can
    # avoid a standalone materializing pass; producing x as [4, B] bf16
    # upstream would eliminate it completely.
    x_t = jnp.pad(x.T, ((0, 0), (0, Bp - B))).astype(compute_dtype)

    resident = lambda a: pl.BlockSpec(a.shape, lambda i: (0, 0))
    in_specs = [pl.BlockSpec((F, TB), lambda i: (0, i))]
    for wp, bp in zip(w_pads, b_pads):
        in_specs += [resident(wp), resident(bp)]

    # Advisory cost: tiny, bandwidth-bound op.
    weight_bytes = sum(int(a.size) * a.dtype.itemsize for a in w_pads + b_pads)
    cost = pl.CostEstimate(
        flops=1408 * Bp,                       # padded-dim MACs * 2
        transcendentals=Bp,                    # one exp (+ vrcp) per sample
        bytes_accessed=12 * Bp + weight_bytes  # bf16 x in + f32 out + weights
    )

    out = pl.pallas_call(
        mlp_kernel,
        out_shape=jax.ShapeDtypeStruct((1, Bp), jnp.float32),
        grid_spec=pltpu.PrefetchScalarGridSpec(
            num_scalar_prefetch=0,
            grid=(n_tiles,),
            in_specs=in_specs,
            out_specs=pl.BlockSpec((1, TB), lambda i: (0, i)),
        ),
        compiler_params=pltpu.CompilerParams(
            dimension_semantics=("parallel",),
            vmem_limit_bytes=48 << 20,                 # big tiles fit on v5e/v6e/v7x
            allow_input_fusion=[True] + [False] * 8,   # let x's transpose/cast fuse in
        ),
        cost_estimate=cost,
    )(x_t,
      w_pads[0], b_pads[0],
      w_pads[1], b_pads[1],
      w_pads[2], b_pads[2],
      w_pads[3], b_pads[3])

    return out[:, :B].T                                      # [B, 1]


def init_params(key):
    """PyTorch-Linear-style uniform(-1/sqrt(fan_in), 1/sqrt(fan_in)) init.
    Weights stored as [in, out] (transpose of torch's [out, in])."""
    dims = [(4, 10), (10, 10), (10, 15), (15, 1)]
    params = []
    for fan_in, fan_out in dims:
        key, kw, kb = jax.random.split(key, 3)
        bound = 1.0 / (fan_in ** 0.5)
        w = jax.random.uniform(kw, (fan_in, fan_out), jnp.float32, -bound, bound)
        b = jax.random.uniform(kb, (fan_out,), jnp.float32, -bound, bound)
        params.append((w, b))
    return params


def reference_forward(x, params, compute_dtype=jnp.float32):
    """Pure-JAX reference. `compute_dtype` mirrors the kernel's matmul-input
    quantization (f32 accumulation in both cases)."""
    q = lambda a: a.astype(compute_dtype).astype(jnp.float32)
    h = q(x)
    for i, (w, b) in enumerate(params):
        h = h @ q(w) + b
        if i < len(params) - 1:
            h = q(jnp.maximum(h, 0.0))
    return jax.nn.sigmoid(h)


if __name__ == "__main__":
    key = jax.random.PRNGKey(0)
    key, kx = jax.random.split(key)

    B = 8
    x = jax.random.normal(kx, (B, 4), jnp.float32)
    # input standardization, mirroring `x = (x - x_mean) / x_std` from main.py
    x = (x - jnp.mean(x, axis=0, keepdims=True)) / (jnp.std(x, axis=0, keepdims=True) + 1e-6)

    params = init_params(key)

    out = jax.block_until_ready(neural_network_forward(x, params))

    ref_bf16 = reference_forward(x, params, compute_dtype=jnp.bfloat16)
    ref_f32 = reference_forward(x, params, compute_dtype=jnp.float32)

    assert out.shape == (B, 1)
    assert jnp.allclose(out, ref_bf16, atol=5e-3, rtol=0.0), (out, ref_bf16)
    assert jnp.allclose(out, ref_f32, atol=3e-2, rtol=0.0), (out, ref_f32)

    # Exercise the multi-tile grid + batch-tail padding path (3 grid steps).
    key, kx2 = jax.random.split(key)
    B2 = 300
    x2 = jax.random.normal(kx2, (B2, 4), jnp.float32)
    out2 = jax.block_until_ready(
        neural_network_forward(x2, params, batch_tile=128))
    ref2 = reference_forward(x2, params, compute_dtype=jnp.float32)
    assert out2.shape == (B2, 1)
    assert jnp.allclose(out2, ref2, atol=3e-2, rtol=0.0)

    print("KERNEL_OK")
</pallas_src>

<mosaic_0001>
module attributes {stable_mosaic.version = 11 : i64} {
  func.func @mlp_kernel(%arg0: i32, %arg1: memref<4x128xbf16, #tpu.memory_space<vmem>>, %arg2: memref<16x4xbf16, #tpu.memory_space<vmem>>, %arg3: memref<16x1xf32, #tpu.memory_space<vmem>>, %arg4: memref<16x16xbf16, #tpu.memory_space<vmem>>, %arg5: memref<16x1xf32, #tpu.memory_space<vmem>>, %arg6: memref<16x16xbf16, #tpu.memory_space<vmem>>, %arg7: memref<16x1xf32, #tpu.memory_space<vmem>>, %arg8: memref<8x16xbf16, #tpu.memory_space<vmem>>, %arg9: memref<8x1xf32, #tpu.memory_space<vmem>>, %arg10: memref<1x128xf32, #tpu.memory_space<vmem>>) attributes {dimension_semantics = [#tpu.dimension_semantics<parallel>], iteration_bounds = array<i64: 1>, scalar_prefetch = 0 : i64, scratch_operands = 0 : i64, tpu.core_type = #tpu.core_type<tc>, window_params = [{transform_indices = @transform_0, window_bounds = array<i64: 4, 128>}, {pipeline_mode = #tpu.pipeline_mode<synchronous>, transform_indices = @transform_1, window_bounds = array<i64: 16, 4>}, {pipeline_mode = #tpu.pipeline_mode<synchronous>, transform_indices = @transform_2, window_bounds = array<i64: 16, 1>}, {pipeline_mode = #tpu.pipeline_mode<synchronous>, transform_indices = @transform_3, window_bounds = array<i64: 16, 16>}, {pipeline_mode = #tpu.pipeline_mode<synchronous>, transform_indices = @transform_4, window_bounds = array<i64: 16, 1>}, {pipeline_mode = #tpu.pipeline_mode<synchronous>, transform_indices = @transform_5, window_bounds = array<i64: 16, 16>}, {pipeline_mode = #tpu.pipeline_mode<synchronous>, transform_indices = @transform_6, window_bounds = array<i64: 16, 1>}, {pipeline_mode = #tpu.pipeline_mode<synchronous>, transform_indices = @transform_7, window_bounds = array<i64: 8, 16>}, {pipeline_mode = #tpu.pipeline_mode<synchronous>, transform_indices = @transform_8, window_bounds = array<i64: 8, 1>}, {transform_indices = @transform_9, window_bounds = array<i64: 1, 128>}]} {
    %c0 = arith.constant 0 : index
    %c0_0 = arith.constant 0 : index
    %0 = vector.load %arg1[%c0, %c0_0] : memref<4x128xbf16, #tpu.memory_space<vmem>>, vector<4x128xbf16>
    %c0_1 = arith.constant 0 : index
    %c0_2 = arith.constant 0 : index
    %1 = vector.load %arg2[%c0_1, %c0_2] : memref<16x4xbf16, #tpu.memory_space<vmem>>, vector<16x4xbf16>
    %cst = arith.constant dense<0.000000e+00> : vector<16x128xf32>
    %2 = tpu.matmul %1, %0, %cst {dimension_numbers = #tpu.dot_dimension_numbers<[1], [0], [0], [1], [0, 0, 1, 1], [], []>} : vector<16x4xbf16>, vector<4x128xbf16>, vector<16x128xf32> -> vector<16x128xf32>
    %c0_3 = arith.constant 0 : index
    %c0_4 = arith.constant 0 : index
    %3 = vector.load %arg3[%c0_3, %c0_4] : memref<16x1xf32, #tpu.memory_space<vmem>>, vector<16x1xf32>
    %4 = vector.broadcast %3 : vector<16x1xf32> to vector<16x128xf32>
    %5 = arith.addf %2, %4 : vector<16x128xf32>
    %cst_5 = arith.constant 0.000000e+00 : f32
    %6 = vector.broadcast %cst_5 : f32 to vector<16x128xf32>
    %7 = arith.maximumf %5, %6 : vector<16x128xf32>
    %c0_6 = arith.constant 0 : index
    %c0_7 = arith.constant 0 : index
    %8 = vector.load %arg4[%c0_6, %c0_7] : memref<16x16xbf16, #tpu.memory_space<vmem>>, vector<16x16xbf16>
    %9 = arith.truncf %7 : vector<16x128xf32> to vector<16x128xbf16>
    %cst_8 = arith.constant dense<0.000000e+00> : vector<16x128xf32>
    %10 = tpu.matmul %8, %9, %cst_8 {dimension_numbers = #tpu.dot_dimension_numbers<[1], [0], [0], [1], [0, 0, 1, 1], [], []>} : vector<16x16xbf16>, vector<16x128xbf16>, vector<16x128xf32> -> vector<16x128xf32>
    %c0_9 = arith.constant 0 : index
    %c0_10 = arith.constant 0 : index
    %11 = vector.load %arg5[%c0_9, %c0_10] : memref<16x1xf32, #tpu.memory_space<vmem>>, vector<16x1xf32>
    %12 = vector.broadcast %11 : vector<16x1xf32> to vector<16x128xf32>
    %13 = arith.addf %10, %12 : vector<16x128xf32>
    %cst_11 = arith.constant 0.000000e+00 : f32
    %14 = vector.broadcast %cst_11 : f32 to vector<16x128xf32>
    %15 = arith.maximumf %13, %14 : vector<16x128xf32>
    %c0_12 = arith.constant 0 : index
    %c0_13 = arith.constant 0 : index
    %16 = vector.load %arg6[%c0_12, %c0_13] : memref<16x16xbf16, #tpu.memory_space<vmem>>, vector<16x16xbf16>
    %17 = arith.truncf %15 : vector<16x128xf32> to vector<16x128xbf16>
    %cst_14 = arith.constant dense<0.000000e+00> : vector<16x128xf32>
    %18 = tpu.matmul %16, %17, %cst_14 {dimension_numbers = #tpu.dot_dimension_numbers<[1], [0], [0], [1], [0, 0, 1, 1], [], []>} : vector<16x16xbf16>, vector<16x128xbf16>, vector<16x128xf32> -> vector<16x128xf32>
    %c0_15 = arith.constant 0 : index
    %c0_16 = arith.constant 0 : index
    %19 = vector.load %arg7[%c0_15, %c0_16] : memref<16x1xf32, #tpu.memory_space<vmem>>, vector<16x1xf32>
    %20 = vector.broadcast %19 : vector<16x1xf32> to vector<16x128xf32>
    %21 = arith.addf %18, %20 : vector<16x128xf32>
    %cst_17 = arith.constant 0.000000e+00 : f32
    %22 = vector.broadcast %cst_17 : f32 to vector<16x128xf32>
    %23 = arith.maximumf %21, %22 : vector<16x128xf32>
    %c0_18 = arith.constant 0 : index
    %c0_19 = arith.constant 0 : index
    %24 = vector.load %arg8[%c0_18, %c0_19] : memref<8x16xbf16, #tpu.memory_space<vmem>>, vector<8x16xbf16>
    %25 = arith.truncf %23 : vector<16x128xf32> to vector<16x128xbf16>
    %cst_20 = arith.constant dense<0.000000e+00> : vector<8x128xf32>
    %26 = tpu.matmul %24, %25, %cst_20 {dimension_numbers = #tpu.dot_dimension_numbers<[1], [0], [0], [1], [0, 0, 1, 1], [], []>} : vector<8x16xbf16>, vector<16x128xbf16>, vector<8x128xf32> -> vector<8x128xf32>
    %c0_21 = arith.constant 0 : index
    %c0_22 = arith.constant 0 : index
    %27 = vector.load %arg9[%c0_21, %c0_22] : memref<8x1xf32, #tpu.memory_space<vmem>>, vector<8x1xf32>
    %28 = vector.broadcast %27 : vector<8x1xf32> to vector<8x128xf32>
    %29 = arith.addf %26, %28 : vector<8x128xf32>
    %30 = vector.extract_strided_slice %29 {offsets = [0, 0], sizes = [1, 128], strides = [1, 1]} : vector<8x128xf32> to vector<1x128xf32>
    %cst_23 = arith.constant -3.000000e+01 : f32
    %31 = vector.broadcast %cst_23 : f32 to vector<1x128xf32>
    %32 = arith.maximumf %30, %31 : vector<1x128xf32>
    %cst_24 = arith.constant 0.000000e+00 : f32
    %33 = vector.broadcast %cst_24 : f32 to vector<1x128xf32>
    %34 = arith.subf %33, %32 : vector<1x128xf32>
    %35 = math.exp %34 : vector<1x128xf32>
    %cst_25 = arith.constant 1.000000e+00 : f32
    %36 = vector.broadcast %cst_25 : f32 to vector<1x128xf32>
    %37 = arith.addf %36, %35 : vector<1x128xf32>
    %38 = tpu.reciprocal %37 {approx = true} : vector<1x128xf32> -> vector<1x128xf32>
    %c0_26 = arith.constant 0 : index
    %c0_27 = arith.constant 0 : index
    %39 = vector.load %arg10[%c0_26, %c0_27] : memref<1x128xf32, #tpu.memory_space<vmem>>, vector<1x128xf32>
    tpu.vector_store %arg10[%c0_26, %c0_27], %38 {strides = array<i32>} : memref<1x128xf32, #tpu.memory_space<vmem>>, vector<1x128xf32>,
    return
  }
  func.func @transform_0(%arg0: i32) -> (i32, i32) {
    %c0_i32 = arith.constant 0 : i32
    %c0_i32_0 = arith.constant 0 : i32
    return %c0_i32, %arg0 : i32, i32
  }
  func.func @transform_1(%arg0: i32) -> (i32, i32) {
    %c0_i32 = arith.constant 0 : i32
    %c0_i32_0 = arith.constant 0 : i32
    %c0_i32_1 = arith.constant 0 : i32
    return %c0_i32, %c0_i32_0 : i32, i32
  }
  func.func @transform_2(%arg0: i32) -> (i32, i32) {
    %c0_i32 = arith.constant 0 : i32
    %c0_i32_0 = arith.constant 0 : i32
    %c0_i32_1 = arith.constant 0 : i32
    return %c0_i32, %c0_i32_0 : i32, i32
  }
  func.func @transform_3(%arg0: i32) -> (i32, i32) {
    %c0_i32 = arith.constant 0 : i32
    %c0_i32_0 = arith.constant 0 : i32
    %c0_i32_1 = arith.constant 0 : i32
    return %c0_i32, %c0_i32_0 : i32, i32
  }
  func.func @transform_4(%arg0: i32) -> (i32, i32) {
    %c0_i32 = arith.constant 0 : i32
    %c0_i32_0 = arith.constant 0 : i32
    %c0_i32_1 = arith.constant 0 : i32
    return %c0_i32, %c0_i32_0 : i32, i32
  }
  func.func @transform_5(%arg0: i32) -> (i32, i32) {
    %c0_i32 = arith.constant 0 : i32
    %c0_i32_0 = arith.constant 0 : i32
    %c0_i32_1 = arith.constant 0 : i32
    return %c0_i32, %c0_i32_0 : i32, i32
  }
  func.func @transform_6(%arg0: i32) -> (i32, i32) {
    %c0_i32 = arith.constant 0 : i32
    %c0_i32_0 = arith.constant 0 : i32
    %c0_i32_1 = arith.constant 0 : i32
    return %c0_i32, %c0_i32_0 : i32, i32
  }
  func.func @transform_7(%arg0: i32) -> (i32, i32) {
    %c0_i32 = arith.constant 0 : i32
    %c0_i32_0 = arith.constant 0 : i32
    %c0_i32_1 = arith.constant 0 : i32
    return %c0_i32, %c0_i32_0 : i32, i32
  }
  func.func @transform_8(%arg0: i32) -> (i32, i32) {
    %c0_i32 = arith.constant 0 : i32
    %c0_i32_0 = arith.constant 0 : i32
    %c0_i32_1 = arith.constant 0 : i32
    return %c0_i32, %c0_i32_0 : i32, i32
  }
  func.func @transform_9(%arg0: i32) -> (i32, i32) {
    %c0_i32 = arith.constant 0 : i32
    %c0_i32_0 = arith.constant 0 : i32
    return %c0_i32, %arg0 : i32, i32
  }
}

</mosaic_0001>

<llo_original>
// kernel: tpu_custom_call.1
$region0: #{tpu_custom_call.1}
  #allocation0 [shape = 'u32[]', space=smem, size = 0x4, offset = 0x4, fixed_abs, tag = 'smem constant byte address 0x4 - core index']
  #allocation1 [shape = 'u32[72,128]{1,0:T(1,128)}', space=vmem, size = 0x9000, scoped, tag = 'internal scratch']
  %s0 = inlined_call_operand.vmem [shape: bf16[4,128], index: 0, kind: input, shape index: {}]
  %s1 = inlined_call_operand.vmem [shape: bf16[16,4], index: 1, kind: input, shape index: {}]
  %s2 = inlined_call_operand.vmem [shape: f32[16,1], index: 2, kind: input, shape index: {}]
  %s3 = inlined_call_operand.vmem [shape: bf16[16,16], index: 3, kind: input, shape index: {}]
  %s4 = inlined_call_operand.vmem [shape: f32[16,1], index: 4, kind: input, shape index: {}]
  %s5 = inlined_call_operand.vmem [shape: bf16[16,16], index: 5, kind: input, shape index: {}]
  %s6 = inlined_call_operand.vmem [shape: f32[16,1], index: 6, kind: input, shape index: {}]
  %s7 = inlined_call_operand.vmem [shape: bf16[8,16], index: 7, kind: input, shape index: {}]
  %s8 = inlined_call_operand.vmem [shape: f32[8,1], index: 8, kind: input, shape index: {}]
  %s9 = inlined_call_operand.hbm [shape: f32[1,128], index: 9, kind: output, shape index: {}]
  %s10 = sld [smem:[#allocation0]]
  $region46: #{tpu_custom_call.1} parent=0
    _
  %s12 = ssub.s32 1, %s10
  %s13 = scalar_select 0, %s12, %s10
  $region1: #{tpu_custom_call.1} parent=0
    #allocation2 [shape = 'u8[512]{0}', space=vmem, size = 0x400, scoped, tag = 'output window, operand 0, single buffered']
    #allocation3 [shape = 's32[1]{0}', space=sflag, size = 0x4, scoped, tag = 'scoped memory for tpu_custom_call.1']
    %14 = vsyncpa [#allocation3], 0
    // Predicated region
    $region2: #{tpu_custom_call.1} parent=1 // pred_check
      _
    $region3: #{tpu_custom_call.1} parent=1 // pred_check_branch
      %16 = sbr.rel (0) target = $region5
    $region4: #{tpu_custom_call.1} parent=1 // pred_region
      _
    $region5: #{tpu_custom_call.1} parent=1 // pred_fallthru
      _
    // Predicated region
    $region6: #{tpu_custom_call.1} parent=1 // pred_check
      _
    $region7: #{tpu_custom_call.1} parent=1 // pred_check_branch
      %18 = sbr.rel (0) target = $region9
    $region8: #{tpu_custom_call.1} parent=1 // pred_region
      _
    $region9: #{tpu_custom_call.1} parent=1 // pred_fallthru
      _
    // Predicated region
    $region10: #{tpu_custom_call.1} parent=1 // pred_check
      _
    $region11: #{tpu_custom_call.1} parent=1 // pred_check_branch
      %20 = sbr.rel (0) target = $region13
    $region12: #{tpu_custom_call.1} parent=1 // pred_region
      _
    $region13: #{tpu_custom_call.1} parent=1 // pred_fallthru
      _
    // Predicated region
    $region14: #{tpu_custom_call.1} parent=1 // pred_check
      _
    $region15: #{tpu_custom_call.1} parent=1 // pred_check_branch
      %22 = sbr.rel (0) target = $region17
    $region16: #{tpu_custom_call.1} parent=1 // pred_region
      _
    $region17: #{tpu_custom_call.1} parent=1 // pred_fallthru
      _
    // Predicated region
    $region18: #{tpu_custom_call.1} parent=1 // pred_check
      _
    $region19: #{tpu_custom_call.1} parent=1 // pred_check_branch
      %24 = sbr.rel (0) target = $region21
    $region20: #{tpu_custom_call.1} parent=1 // pred_region
      _
    $region21: #{tpu_custom_call.1} parent=1 // pred_fallthru
      _
    // Predicated region
    $region22: #{tpu_custom_call.1} parent=1 // pred_check
      _
    $region23: #{tpu_custom_call.1} parent=1 // pred_check_branch
      %26 = sbr.rel (0) target = $region25
    $region24: #{tpu_custom_call.1} parent=1 // pred_region
      _
    $region25: #{tpu_custom_call.1} parent=1 // pred_fallthru
      _
    // Predicated region
    $region26: #{tpu_custom_call.1} parent=1 // pred_check
      _
    $region27: #{tpu_custom_call.1} parent=1 // pred_check_branch
      %28 = sbr.rel (0) target = $region29
    $region28: #{tpu_custom_call.1} parent=1 // pred_region
      _
    $region29: #{tpu_custom_call.1} parent=1 // pred_fallthru
      _
    // Predicated region
    $region30: #{tpu_custom_call.1} parent=1 // pred_check
      _
    $region31: #{tpu_custom_call.1} parent=1 // pred_check_branch
      %30 = sbr.rel (0) target = $region33
    $region32: #{tpu_custom_call.1} parent=1 // pred_region
      _
    $region33: #{tpu_custom_call.1} parent=1 // pred_fallthru
      _
    // Predicated region
    $region34: #{tpu_custom_call.1} parent=1 // pred_check
      _
    $region35: #{tpu_custom_call.1} parent=1 // pred_check_branch
      %32 = sbr.rel (0) target = $region37
    $region36: #{tpu_custom_call.1} parent=1 // pred_region
      _
    $region37: #{tpu_custom_call.1} parent=1 // pred_fallthru
      _
    %v34 = vld [vmem:[%s0] sm:$0x3]
    %v35 = vld [vmem:[%s1] sm:$0xf]
    %v36 = vld [vmem:[%s1 + $0x4] sm:$0xf]
    %v37 = vld [vmem:[%s2] sm:$0xff]
    %v38 = vld [vmem:[%s2 + $0x8] sm:$0xff]
    %40 = vset.pattern.permute.xlu0 0
    %41 = vperm.xlu0 %40, %v37
    %v42 = vpop.permute.xlu0 %41
    %45 = vset.pattern.permute.xlu0 0
    %46 = vperm.xlu0 %45, %v38
    %v47 = vpop.permute.xlu0 %46
    %v51 = vunpack.c.l.b16 %v35
    %v52 = vunpack.c.l.b16 %v36
    %v53 = vpack.c.b16 %v52, %v51
    %vm54 = vcmask 31744
    %v56 = vsel %vm54, %v53, 0
    %vm58 = vcmask 1041408
    %v60 = vsel %vm58, %v34, 0
    %62 = vmatpush.bf16.msra.mxu0 0
    %63 = vmatpush.bf16.msra.mxu0 0
    %64 = vmatpush.bf16.msra.mxu0 0
    %65 = vmatpush.bf16.msra.mxu0 0
    %66 = vmatpush.bf16.msra.mxu0 0
    %67 = vmatpush.bf16.msra.mxu0 0
    %68 = vmatpush.bf16.msra.mxu0 0
    %69 = vmatpush.bf16.msra.mxu0 %v60
    %70 = vmatmul.bf16.gmra.mxu0 %v56
    %v71 = vpop.f32.mrf.mxu0
    %v72 = vadd.f32 %v42, %v71
    %v73 = vpop.f32.mrf.mxu0
    %v74 = vadd.f32 %v47, %v73
    %75 = vdwg.mxu0
    %v76 = vmax.f32 %v72, 0.0
    %v77 = vmax.f32 %v74, 0.0
    %v78 = vld [vmem:[%s3] sm:$0xf]
    %v79 = vld [vmem:[%s3 + $0x4] sm:$0xf]
    %v80 = vpack.c.bf16 %v77, %v76
    %v81 = vld [vmem:[%s4] sm:$0xff]
    %v82 = vld [vmem:[%s4 + $0x8] sm:$0xff]
    %84 = vset.pattern.permute.xlu0 0
    %85 = vperm.xlu0 %84, %v81
    %v86 = vpop.permute.xlu0 %85
    %89 = vset.pattern.permute.xlu0 0
    %90 = vperm.xlu0 %89, %v82
    %v91 = vpop.permute.xlu0 %90
    %v95 = vunpack.c.l.b16 %v78
    %v96 = vunpack.c.l.b16 %v79
    %v97 = vpack.c.b16 %v96, %v95
    %vm98 = vcmask 130048
    %v100 = vsel %vm98, %v97, 0
    %102 = vmatpush.bf16.msra.mxu0 0
    %103 = vmatpush.bf16.msra.mxu0 0
    %104 = vmatpush.bf16.msra.mxu0 0
    %105 = vmatpush.bf16.msra.mxu0 0
    %106 = vmatpush.bf16.msra.mxu0 0
    %107 = vmatpush.bf16.msra.mxu0 0
    %108 = vmatpush.bf16.msra.mxu0 0
    %109 = vmatpush.bf16.msra.mxu0 %v80
    %110 = vmatmul.bf16.gmra.mxu0 %v100
    %v111 = vpop.f32.mrf.mxu0
    %v112 = vadd.f32 %v86, %v111
    %v113 = vpop.f32.mrf.mxu0
    %v114 = vadd.f32 %v91, %v113
    %115 = vdwg.mxu0
    %v116 = vmax.f32 %v112, 0.0
    %v117 = vmax.f32 %v114, 0.0
    %v118 = vld [vmem:[%s5] sm:$0xf]
    %v119 = vld [vmem:[%s5 + $0x4] sm:$0xf]
    %v120 = vpack.c.bf16 %v117, %v116
    %v121 = vld [vmem:[%s6] sm:$0xff]
    %v122 = vld [vmem:[%s6 + $0x8] sm:$0xff]
    %124 = vset.pattern.permute.xlu0 0
    %125 = vperm.xlu0 %124, %v121
    %v126 = vpop.permute.xlu0 %125
    %129 = vset.pattern.permute.xlu0 0
    %130 = vperm.xlu0 %129, %v122
    %v131 = vpop.permute.xlu0 %130
    %v135 = vunpack.c.l.b16 %v118
    %v136 = vunpack.c.l.b16 %v119
    %v137 = vpack.c.b16 %v136, %v135
    %v139 = vsel %vm98, %v137, 0
    %141 = vmatpush.bf16.msra.mxu0 0
    %142 = vmatpush.bf16.msra.mxu0 0
    %143 = vmatpush.bf16.msra.mxu0 0
    %144 = vmatpush.bf16.msra.mxu0 0
    %145 = vmatpush.bf16.msra.mxu0 0
    %146 = vmatpush.bf16.msra.mxu0 0
    %147 = vmatpush.bf16.msra.mxu0 0
    %148 = vmatpush.bf16.msra.mxu0 %v120
    %149 = vmatmul.bf16.gmra.mxu0 %v139
    %v150 = vpop.f32.mrf.mxu0
    %v151 = vadd.f32 %v126, %v150
    %v152 = vpop.f32.mrf.mxu0
    %v153 = vadd.f32 %v131, %v152
    %154 = vdwg.mxu0
    %v155 = vmax.f32 %v151, 0.0
    %v156 = vmax.f32 %v153, 0.0
    %v157 = vld [vmem:[%s7] sm:$0xf]
    %v158 = vpack.c.bf16 %v156, %v155
    %v159 = vld [vmem:[%s8] sm:$0xff]
    %161 = vset.pattern.permute.xlu0 0
    %162 = vperm.xlu0 %161, %v159
    %v163 = vpop.permute.xlu0 %162
    %v166 = vsel %vm98, %v157, 0
    %168 = vmatpush.bf16.msra.mxu0 0
    %169 = vmatpush.bf16.msra.mxu0 0
    %170 = vmatpush.bf16.msra.mxu0 0
    %171 = vmatpush.bf16.msra.mxu0 0
    %172 = vmatpush.bf16.msra.mxu0 0
    %173 = vmatpush.bf16.msra.mxu0 0
    %174 = vmatpush.bf16.msra.mxu0 0
    %175 = vmatpush.bf16.msra.mxu0 %v158
    %176 = vmatmul.bf16.gmra.mxu0 %v166
    %v177 = vpop.f32.mrf.mxu0
    %v178 = vadd.f32 %v163, %v177
    %v179 = vpop.f32.mrf.mxu0
    %180 = vdwg.mxu0
    %v181 = vmax.f32 %v178, -30.0
    %v182 = vsub.f32 0.0, %v181
    %v183 = vmul.f32 %v182, 1.442695
    %v184 = vpow.pop %v183
    %v185 = vadd.f32 %v184, 1.0
    %v186 = vrcp.pop %v185
    %187 = vst [vmem:[#allocation2] sm:$0x1] %v186
    // Predicated region
    $region38: #{tpu_custom_call.1} parent=1 // pred_check
      _
    $region39: #{tpu_custom_call.1} parent=1 // pred_check_branch
      %189 = sbr.rel (0) target = $region41
    $region40: #{tpu_custom_call.1} parent=1 // pred_region
      %191 = vsyncadd [#allocation3], 0
      %s193 = sshll.u32 [#allocation2], 4
      %s194 = int_to_ptr.vmem [resolvable:$true] %s193
      %s195 = sshll.u32 %s9, 4
      %s196 = int_to_ptr.hbm [resolvable:$true] %s195
      %198 = dma.vmem_to_hbm [thread:$0]  %s194, 16, %s196, [#allocation3]
    $region41: #{tpu_custom_call.1} parent=1 // pred_fallthru
      _
    // Predicated region
    $region42: #{tpu_custom_call.1} parent=1 // pred_check
      _
    $region43: #{tpu_custom_call.1} parent=1 // pred_check_branch
      %200 = sbr.rel (0) target = $region45
    $region44: #{tpu_custom_call.1} parent=1 // pred_region
      %202 = dma.done [#allocation3], 16
    $region45: #{tpu_custom_call.1} parent=1 // pred_fallthru
      _
    %203 = vsyncpa [#allocation3], 1

</llo_original>
